<compile_context>
chip_gen: v5e
topology: v5e:2x2
jax: 0.10.0
libtpu: 0.0.40
codegen_flags: <defaults>
</compile_context>

<pallas_src>
import functools

import jax
import jax.numpy as jnp
from jax.experimental import pallas as pl
from jax.experimental.pallas import tpu as pltpu

EPS = 1e-06

# Stay comfortably under the smallest per-TensorCore VMEM (v7x: 64 MiB).
_VMEM_LIMIT_BYTES = 56 * 1024 * 1024
# Per-step input-tile target; measured data shows ~2 MiB-class tiles already
# sit at the HBM roofline while keeping many grid steps for pipelining.
_TARGET_TILE_BYTES = 2 << 20


def _evsoftmax_kernel(x_ref, o_ref, *, training: bool, n_valid: int):
    """One row-block: full (possibly lane-padded) rows live in VMEM."""
    x = x_ref[...]
    if x.dtype != jnp.float32:
        x = x.astype(jnp.float32)
    n_pad = x.shape[-1]

    if n_valid != n_pad:
        # Feature dim was padded to a multiple of 128 for lane-dense stores;
        # mask padded columns out of every row reduction.
        col = jax.lax.broadcasted_iota(jnp.int32, x.shape, x.ndim - 1)
        valid = col < n_valid
        row_sum = jnp.sum(jnp.where(valid, x, 0.0), axis=-1, keepdims=True)
        m = jnp.max(jnp.where(valid, x, -jnp.inf), axis=-1, keepdims=True)
    else:
        valid = None
        row_sum = jnp.sum(x, axis=-1, keepdims=True)
        m = jnp.max(x, axis=-1, keepdims=True)

    mean = row_sum * jnp.float32(1.0 / n_valid)
    off_val = jnp.float32(EPS if training else 0.0)

    # softmax(x)*mask / sum(softmax(x)*mask) == exp(x-m)*mask / sum(exp(x-m)*mask)
    # (softmax denominator cancels) -> one exp per element, mask folded in,
    # no separate full-tile mask_offset temporary.
    em = jnp.where(x < mean, off_val, jnp.float32(1.0)) * jnp.exp(x - m)
    if valid is not None:
        em = jnp.where(valid, em, 0.0)

    # Per-row normalizer is only (rows, 1) scalars -> exact reciprocal is cheap
    # and keeps the 1e-5 tolerance vs. the reference.
    inv = 1.0 / jnp.sum(em, axis=-1, keepdims=True)
    o_ref[...] = (em * inv).astype(o_ref.dtype)


def _pick_block_rows(B: int, Np: int, itemsize: int,
                     target_tile_bytes: int = _TARGET_TILE_BYTES,
                     min_steps: int = 8) -> int:
    """Sublane-aligned row block: ~target-sized tiles, many grid steps."""
    sub = max(8, 32 // max(1, itemsize))  # 8 rows f32, 16 bf16, 32 int8
    # (a) keep the per-step input tile around target_tile_bytes
    rows_by_bytes = (target_tile_bytes // max(1, Np * itemsize)) // sub * sub
    rows_by_bytes = max(sub, rows_by_bytes)
    # (b) aim for >= min_steps grid steps (pipeline overlap + v7x 2-TC balance)
    rows_by_steps = (max(1, B // min_steps) // sub) * sub
    rows_by_steps = max(sub, rows_by_steps)
    block_rows = max(sub, min(rows_by_bytes, rows_by_steps))
    # never larger than the (sublane-rounded) batch itself
    block_rows = min(block_rows, max(sub, pl.cdiv(B, sub) * sub))
    return block_rows


def _check_block_fits(block_rows: int, Np: int, itemsize: int) -> None:
    # 2x double-buffered in + out tiles (I/O dtype) + ~5 full-tile f32 temps.
    need = block_rows * Np * (4 * itemsize + 5 * 4)
    if need > int(_VMEM_LIMIT_BYTES * 0.85):
        # TODO(synk): fall back to a two-pass (stats pass + normalize pass)
        # kernel tiled over N when a single row block cannot fit VMEM.
        raise ValueError(
            f"EvSoftmax row block ({block_rows} x {Np}, ~{need >> 20} MiB) does "
            f"not fit the VMEM budget; feature dim too large for single-pass "
            f"row blocks.")


def evsoftmax(x: jax.Array, training: bool = True,
              block_rows: int | None = None) -> jax.Array:
    """EvSoftmax over the last axis of a 2D input (batch, features).

    Higher-rank inputs with dim=-1 can be flattened to 2D outside.
    Compute is f32 internally (exact for f32 I/O; for bf16 inputs the mask
    comparison is done in f32 rather than bf16 like the reference).
    """
    assert x.ndim == 2, "kernel expects 2D (batch, features); reshape other ranks outside"
    B, N = x.shape
    itemsize = jnp.dtype(x.dtype).itemsize

    # Lane-dense output stores: pad the feature dim to a multiple of 128 and
    # mask inside the kernel.  Static no-op when N is already 128-aligned.
    Np = ((N + 127) // 128) * 128
    xp = jnp.pad(x, ((0, 0), (0, Np - N))) if Np != N else x

    if block_rows is None:
        block_rows = _pick_block_rows(B, Np, itemsize)
    _check_block_fits(block_rows, Np, itemsize)

    kernel = functools.partial(_evsoftmax_kernel, training=training, n_valid=N)

    out = pl.pallas_call(
        kernel,
        out_shape=jax.ShapeDtypeStruct((B, Np), x.dtype),
        grid=(pl.cdiv(B, block_rows),),   # ragged last block: OOB rows masked
        in_specs=[pl.BlockSpec((block_rows, Np), lambda i: (i, 0))],
        out_specs=pl.BlockSpec((block_rows, Np), lambda i: (i, 0)),
        compiler_params=pltpu.CompilerParams(
            dimension_semantics=("parallel",),
            vmem_limit_bytes=_VMEM_LIMIT_BYTES,
        ),
        cost_estimate=pl.CostEstimate(
            flops=8 * B * N,                       # cmp/select/sub/mul + 3 reductions
            transcendentals=B * N,                 # one exp per element
            bytes_accessed=B * N * itemsize + B * N * itemsize,  # in + out
        ),
    )(xp)
    return out[:, :N] if Np != N else out


def _reference(x: jnp.ndarray, training: bool = True) -> jnp.ndarray:
    # Pure-JAX reference mirroring the PyTorch module exactly.
    mean = jnp.mean(x, axis=-1, keepdims=True)
    mask_offset = jnp.where(x < mean, EPS if training else 0.0, 1.0).astype(x.dtype)
    pu = jax.nn.softmax(x, axis=-1) * mask_offset
    return pu / jnp.sum(pu, axis=-1, keepdims=True)


if __name__ == "__main__":
    key = jax.random.PRNGKey(0)
    k0, k1 = jax.random.split(key)

    # Small (batch, features); reduction along the last dim (dim=-1).
    B, N = 16, 128
    x = jax.random.normal(k0, (B, N), dtype=jnp.float32)

    out = jax.block_until_ready(evsoftmax(x, training=True))
    ref = _reference(x, training=True)
    assert out.shape == ref.shape and out.dtype == ref.dtype
    assert jnp.allclose(out, ref, atol=1e-5, rtol=1e-5), "mismatch vs reference (training)"

    out_eval = jax.block_until_ready(evsoftmax(x, training=False))
    ref_eval = _reference(x, training=False)
    assert jnp.allclose(out_eval, ref_eval, atol=1e-5, rtol=1e-5), "mismatch vs reference (eval)"

    # Ragged shapes: B not a multiple of the row block, N not a multiple of 128
    # (exercises the cdiv-masked grid and the lane-padding + column-mask path).
    x2 = jax.random.normal(k1, (13, 96), dtype=jnp.float32)
    out2 = jax.block_until_ready(evsoftmax(x2, training=True))
    ref2 = _reference(x2, training=True)
    assert out2.shape == ref2.shape
    assert jnp.allclose(out2, ref2, atol=1e-5, rtol=1e-5), "mismatch vs reference (ragged)"

    print("KERNEL_OK")
</pallas_src>

<mosaic_0001>
module attributes {stable_mosaic.version = 11 : i64} {
  func.func @_evsoftmax_kernel(%arg0: i32, %arg1: memref<8x128xf32, #tpu.memory_space<vmem>>, %arg2: memref<8x128xf32, #tpu.memory_space<vmem>>) attributes {dimension_semantics = [#tpu.dimension_semantics<parallel>], iteration_bounds = array<i64: 2>, scalar_prefetch = 0 : i64, scratch_operands = 0 : i64, tpu.core_type = #tpu.core_type<tc>, window_params = [{transform_indices = @transform_0, window_bounds = array<i64: 8, 128>}, {transform_indices = @transform_1, window_bounds = array<i64: 8, 128>}]} {
    %c0 = arith.constant 0 : index
    %c0_0 = arith.constant 0 : index
    %0 = vector.load %arg1[%c0, %c0_0] : memref<8x128xf32, #tpu.memory_space<vmem>>, vector<8x128xf32>
    %cst = arith.constant dense<0.000000e+00> : vector<8xf32>
    %1 = vector.multi_reduction <add>, %0, %cst [1] : vector<8x128xf32> to vector<8xf32>
    %2 = vector.shape_cast %1 : vector<8xf32> to vector<8x1xf32>
    %cst_1 = arith.constant dense<0xFF800000> : vector<8xf32>
    %3 = vector.multi_reduction <maximumf>, %0, %cst_1 [1] : vector<8x128xf32> to vector<8xf32>
    %4 = vector.shape_cast %3 : vector<8xf32> to vector<8x1xf32>
    %cst_2 = arith.constant 7.812500e-03 : f32
    %5 = vector.broadcast %cst_2 : f32 to vector<8x1xf32>
    %6 = arith.mulf %2, %5 : vector<8x1xf32>
    %7 = vector.broadcast %6 : vector<8x1xf32> to vector<8x128xf32>
    %8 = arith.cmpf olt, %0, %7 : vector<8x128xf32>
    %cst_3 = arith.constant 9.99999997E-7 : f32
    %cst_4 = arith.constant 1.000000e+00 : f32
    %9 = vector.broadcast %cst_3 : f32 to vector<8x128xf32>
    %10 = vector.broadcast %cst_4 : f32 to vector<8x128xf32>
    %11 = arith.select %8, %9, %10 : vector<8x128xi1>, vector<8x128xf32>
    %12 = vector.broadcast %4 : vector<8x1xf32> to vector<8x128xf32>
    %13 = arith.subf %0, %12 : vector<8x128xf32>
    %14 = math.exp %13 : vector<8x128xf32>
    %15 = arith.mulf %11, %14 : vector<8x128xf32>
    %cst_5 = arith.constant dense<0.000000e+00> : vector<8xf32>
    %16 = vector.multi_reduction <add>, %15, %cst_5 [1] : vector<8x128xf32> to vector<8xf32>
    %17 = vector.shape_cast %16 : vector<8xf32> to vector<8x1xf32>
    %cst_6 = arith.constant 1.000000e+00 : f32
    %18 = vector.broadcast %cst_6 : f32 to vector<8x1xf32>
    %19 = arith.divf %18, %17 : vector<8x1xf32>
    %20 = vector.broadcast %19 : vector<8x1xf32> to vector<8x128xf32>
    %21 = arith.mulf %15, %20 : vector<8x128xf32>
    %c0_7 = arith.constant 0 : index
    %c0_8 = arith.constant 0 : index
    %22 = vector.load %arg2[%c0_7, %c0_8] : memref<8x128xf32, #tpu.memory_space<vmem>>, vector<8x128xf32>
    tpu.vector_store %arg2[%c0_7, %c0_8], %21 {strides = array<i32>} : memref<8x128xf32, #tpu.memory_space<vmem>>, vector<8x128xf32>,
    return
  }
  func.func @transform_0(%arg0: i32) -> (i32, i32) {
    %c0_i32 = arith.constant 0 : i32
    %c0_i32_0 = arith.constant 0 : i32
    return %arg0, %c0_i32 : i32, i32
  }
  func.func @transform_1(%arg0: i32) -> (i32, i32) {
    %c0_i32 = arith.constant 0 : i32
    %c0_i32_0 = arith.constant 0 : i32
    return %arg0, %c0_i32 : i32, i32
  }
}

</mosaic_0001>

<llo_original>
// kernel: tpu_custom_call.1
$region0: #{tpu_custom_call.1}
  #allocation0 [shape = 'u32[]', space=smem, size = 0x4, offset = 0x4, fixed_abs, tag = 'smem constant byte address 0x4 - core index']
  #allocation1 [shape = 'u32[72,128]{1,0:T(1,128)}', space=vmem, size = 0x9000, scoped, tag = 'internal scratch']
  %s0 = inlined_call_operand.hbm [shape: f32[16,128], index: 0, kind: input, shape index: {}]
  %s1 = inlined_call_operand.hbm [shape: f32[16,128], index: 1, kind: output, shape index: {}]
  %s2 = sld [smem:[#allocation0]]
  $region41: #{tpu_custom_call.1} parent=0
    _
  %s4 = ssub.s32 1, %s2
  %s5 = scalar_select 0, %s4, %s2
  $region1: #{tpu_custom_call.1} parent=0
    #allocation2 [shape = 'u8[8192]{0}', space=vmem, size = 0x2000, scoped, tag = 'input window, operand 0']
    #allocation3 [shape = 's32[2]{0}', space=sflag, size = 0x8, scoped, tag = 'scoped memory for tpu_custom_call.1']
    #allocation4 [shape = 's32[2]{0}', space=sflag, size = 0x8, scoped, tag = 'scoped memory for tpu_custom_call.1']
    #allocation5 [shape = 'u8[8192]{0}', space=vmem, size = 0x2000, scoped, tag = 'output window, operand 0']
    %6 = vsyncpa [#allocation3], 0
    %s7 = scalar_lea.sflag [#allocation3], 1
    %8 = vsyncpa %s7, 0
    %9 = vsyncpa [#allocation4], 0
    %s10 = scalar_lea.sflag [#allocation4], 1
    %11 = vsyncpa %s10, 0
    loop: start=0, step=1, limit=4
    $region2: #{tpu_custom_call.1} parent=1 // loop_pre_header
      _
    $region3: #{tpu_custom_call.1} parent=1 // loop_header
      %s13 = sphi 0, %s17
      %p14 = scmp.ge.s32.totalorder %s13, 4
      %s23 = sphi 0, %s25
      %s26 = sphi 0, %s23
      %s27 = sphi 0, %s26
      %s43 = sphi 0, %s27
      %s49 = sphi 0, %s51
      %s52 = sphi 0, %s49
      %s53 = sphi 0, %s52
      %s69 = sphi 0, %s53
    $region4: #{tpu_custom_call.1} parent=1 // loop_header_branch
      %16 = sbr.rel (%p14) target = $region8
    $region5: #{tpu_custom_call.1} parent=1 // loop_body
      %s18 = ssub.s32 %s13, 1
      %s19 = ssub.s32 %s13, 2
      %s20 = sadd.s32 %s13, 1
      %s21 = ssub.s32 %s13, %s20
      %p22 = scmp.eq.s32.totalorder %s21, 0
      %s24 = sadd.s32 %s23, 1
      %s25 = scalar_select %p22, %s23, %s24
      %p28 = pneg %p22
      %p29 = scmp.eq.s32.totalorder %s13, 1
      %p30 = por %p28, %p29
      %p31 = scmp.ne.s32.totalorder %s23, %s26
      %p32 = scmp.eq.s32.totalorder %s13, 0
      %p33 = por %p31, %p32
      %p34 = scmp.ne.s32.totalorder %s23, %s26
      %p35 = scmp.eq.s32.totalorder %s18, 1
      %p36 = por %p34, %p35
      %p37 = scmp.ne.s32.totalorder %s26, %s27
      %p38 = scmp.eq.s32.totalorder %s18, 0
      %p39 = por %p37, %p38
      %p40 = scmp.ne.s32.totalorder %s26, %s27
      %p41 = scmp.eq.s32.totalorder %s19, 1
      %p42 = por %p40, %p41
      %p44 = scmp.ne.s32.totalorder %s27, %s43
      %p45 = scmp.eq.s32.totalorder %s19, 0
      %p46 = por %p44, %p45
      %s47 = ssub.s32 %s13, %s20
      %p48 = scmp.eq.s32.totalorder %s47, 0
      %s50 = sadd.s32 %s49, 1
      %s51 = scalar_select %p48, %s49, %s50
      %p54 = pneg %p48
      %p55 = scmp.eq.s32.totalorder %s13, 1
      %p56 = por %p54, %p55
      %p57 = scmp.ne.s32.totalorder %s49, %s52
      %p58 = scmp.eq.s32.totalorder %s13, 0
      %p59 = por %p57, %p58
      %p60 = scmp.ne.s32.totalorder %s49, %s52
      %p61 = scmp.eq.s32.totalorder %s18, 1
      %p62 = por %p60, %p61
      %p63 = scmp.ne.s32.totalorder %s52, %s53
      %p64 = scmp.eq.s32.totalorder %s18, 0
      %p65 = por %p63, %p64
      %p66 = scmp.ne.s32.totalorder %s52, %s53
      %p67 = scmp.eq.s32.totalorder %s19, 1
      %p68 = por %p66, %p67
      %p70 = scmp.ne.s32.totalorder %s53, %s69
      %p71 = scmp.eq.s32.totalorder %s19, 0
      %p72 = por %p70, %p71
      %p73 = scmp.le.s32.totalorder 1, %s13
      %p74 = scmp.lt.s32.totalorder %s13, 3
      %p75 = pnand %p73, %p74
      %p76 = pneg %p75
      // Predicated region
      $region9: #{tpu_custom_call.1} parent=5 // pred_check
        _
      $region10: #{tpu_custom_call.1} parent=5 // pred_check_branch
        %78 = sbr.rel (%p75) target = $region12
      $region11: #{tpu_custom_call.1} parent=5 // pred_region
        %s79 = ssub.s32 %s13, 1
      $region12: #{tpu_custom_call.1} parent=5 // pred_fallthru
        _
      %p80 = scmp.lt.s32.totalorder %s13, 2
      // Predicated region
      $region13: #{tpu_custom_call.1} parent=5 // pred_check
        %p81 = pneg %p80
      $region14: #{tpu_custom_call.1} parent=5 // pred_check_branch
        %83 = sbr.rel (%p81) target = $region16
      $region15: #{tpu_custom_call.1} parent=5 // pred_region
        // Predicated region
        $region17: #{tpu_custom_call.1} parent=15 // pred_check
          %p84 = pneg %p33
        $region18: #{tpu_custom_call.1} parent=15 // pred_check_branch
          %86 = sbr.rel (%p84) target = $region20
        $region19: #{tpu_custom_call.1} parent=15 // pred_region
          %s87 = sand.u32 %s23, 1
          %s88 = scalar_lea.sflag [#allocation3], %s87
          %s89 = sand.u32 %s23, 1
          %s90 = smul.addr %s89, 8
          %s91 = scalar_lea.vmem [#allocation2], %s90
          %93 = vsyncadd %s88, 0
          %s94 = smul.addr %s13, 8
          %s95 = scalar_lea.hbm %s0, %s94
          %s97 = sshll.u32 %s95, 4
          %s98 = int_to_ptr.hbm [resolvable:$true] %s97
          %s99 = sshll.u32 %s91, 4
          %s100 = int_to_ptr.vmem [resolvable:$true] %s99
          %102 = dma.hbm_to_vmem [thread:$0]  %s98, 128, %s100, %s88
        $region20: #{tpu_custom_call.1} parent=15 // pred_fallthru
          _
      $region16: #{tpu_custom_call.1} parent=5 // pred_fallthru
        _
      %p103 = scmp.le.s32.totalorder 1, %s13
      %p104 = scmp.lt.s32.totalorder %s13, 3
      %p105 = pnand %p103, %p104
      %p106 = pneg %p105
      // Predicated region
      $region21: #{tpu_custom_call.1} parent=5 // pred_check
        _
      $region22: #{tpu_custom_call.1} parent=5 // pred_check_branch
        %108 = sbr.rel (%p105) target = $region24
      $region23: #{tpu_custom_call.1} parent=5 // pred_region
        %s109 = ssub.s32 %s13, 1
        %s110 = sand.u32 %s26, 1
        %s111 = scalar_lea.sflag [#allocation3], %s110
        %s112 = sand.u32 %s26, 1
        %s113 = smul.addr %s112, 8
        %s114 = scalar_lea.vmem [#allocation2], %s113
        // Predicated region
        $region25: #{tpu_custom_call.1} parent=23 // pred_check
          %p115 = pneg %p39
        $region26: #{tpu_custom_call.1} parent=23 // pred_check_branch
          %117 = sbr.rel (%p115) target = $region28
        $region27: #{tpu_custom_call.1} parent=23 // pred_region
          %119 = dma.done %s111, 128
        $region28: #{tpu_custom_call.1} parent=23 // pred_fallthru
          _
        %s120 = sand.u32 %s26, 1
        %s121 = scalar_lea.sflag [#allocation3], %s120
        %s122 = sand.u32 %s26, 1
        %s123 = smul.addr %s122, 8
        %s124 = scalar_lea.vmem [#allocation2], %s123
        %p125 = pneg %p39
        %p126 = pneg %p36
        %p127 = pneg %p65
        %p128 = pneg %p62
        %s129 = sand.u32 %s52, 1
        %s130 = scalar_lea.sflag [#allocation4], %s129
        %s131 = sand.u32 %s52, 1
        %s132 = smul.addr %s131, 8
        %s133 = scalar_lea.vmem [#allocation5], %s132
        %v134 = vld [vmem:[%s114] sm:$0xff]
        %135 = vadd.xlane.f32.xlu0 %v134
        %v136 = vpop.xlane.xlu0 %135
        %137 = vmax.xlane.f32.xlu0 %v134
        %v138 = vpop.xlane.xlu0 %137
        %v139 = vmul.f32 %v136, 0.0078125
        %vm140 = vcmp.lt.f32.partialorder %v134, %v139
        %v141 = vsel %vm140, 1e-06, 1.0
        %v142 = vsub.f32 %v134, %v138
        %v143 = vmul.f32 %v142, 1.442695
        %v144 = vpow.pop %v143
        %v145 = vmul.f32 %v141, %v144
        %146 = vadd.xlane.f32.xlu0 %v145
        %v147 = vpop.xlane.xlu0 %146
        %v148 = vrcp.pop %v147
        %v149 = vmul.f32 %v147, %v148
        %v150 = vsub.f32 1.0, %v149
        %v151 = vmul.f32 %v148, %v150
        %v152 = vadd.f32 %v148, %v151
        %vm153 = vweird.f32 %v147
        %vm154 = vweird.f32 %v148
        %vm155 = vmor %vm153, %vm154
        %v156 = vsel %vm155, %v148, %v152
        %v157 = vand.u32 2147483647, %v147
        %vm158 = vcmp.eq.f32.partialorder %v157, 8.507059e+37
        %v159 = vand.u32 %v147, 2147483648
        %v160 = vor.u32 1.1754944e-38, %v159
        %v161 = vsel %vm158, %v160, %v156
        %v162 = vmul.f32 1.0, %v161
        %v163 = vmul.f32 %v145, %v162
        %164 = vst [vmem:[%s133] sm:$0xff] %v163
        %s165 = sand.u32 %s52, 1
        %s166 = scalar_lea.sflag [#allocation4], %s165
        %s167 = sand.u32 %s52, 1
        %s168 = smul.addr %s167, 8
        %s169 = scalar_lea.vmem [#allocation5], %s168
        // Predicated region
        $region29: #{tpu_custom_call.1} parent=23 // pred_check
          %p170 = pneg %p62
        $region30: #{tpu_custom_call.1} parent=23 // pred_check_branch
          %172 = sbr.rel (%p170) target = $region32
        $region31: #{tpu_custom_call.1} parent=23 // pred_region
          %174 = vsyncadd %s166, 0
          %s175 = smul.addr %s18, 8
          %s176 = scalar_lea.hbm %s1, %s175
          %s178 = sshll.u32 %s169, 4
          %s179 = int_to_ptr.vmem [resolvable:$true] %s178
          %s180 = sshll.u32 %s176, 4
          %s181 = int_to_ptr.hbm [resolvable:$true] %s180
          %183 = dma.vmem_to_hbm [thread:$0]  %s179, 128, %s181, %s166
        $region32: #{tpu_custom_call.1} parent=23 // pred_fallthru
          _
      $region24: #{tpu_custom_call.1} parent=5 // pred_fallthru
        _
      %p184 = scmp.le.s32.totalorder 2, %s13
      // Predicated region
      $region33: #{tpu_custom_call.1} parent=5 // pred_check
        %p185 = pneg %p184
      $region34: #{tpu_custom_call.1} parent=5 // pred_check_branch
        %187 = sbr.rel (%p185) target = $region36
      $region35: #{tpu_custom_call.1} parent=5 // pred_region
        %s188 = ssub.s32 %s13, 2
        // Predicated region
        $region37: #{tpu_custom_call.1} parent=35 // pred_check
          %p189 = pneg %p68
        $region38: #{tpu_custom_call.1} parent=35 // pred_check_branch
          %191 = sbr.rel (%p189) target = $region40
        $region39: #{tpu_custom_call.1} parent=35 // pred_region
          %s192 = sand.u32 %s53, 1
          %s193 = scalar_lea.sflag [#allocation4], %s192
          %s194 = sand.u32 %s53, 1
          %s195 = smul.addr %s194, 8
          %s196 = scalar_lea.vmem [#allocation5], %s195
          %198 = dma.done %s193, 128
        $region40: #{tpu_custom_call.1} parent=35 // pred_fallthru
          _
      $region36: #{tpu_custom_call.1} parent=5 // pred_fallthru
        _
    $region6: #{tpu_custom_call.1} parent=1 // loop_footer
      %s17 = sadd.s32 1, %s13
    $region7: #{tpu_custom_call.1} parent=1 // loop_footer_branch
      %12 = sbr.rel target = $region3
    $region8: #{tpu_custom_call.1} parent=1 // loop_exit
      _
    %199 = vsyncpa [#allocation3], 1
    %s200 = scalar_lea.sflag [#allocation3], 1
    %201 = vsyncpa %s200, 1
    %202 = vsyncpa [#allocation4], 1
    %s203 = scalar_lea.sflag [#allocation4], 1
    %204 = vsyncpa %s203, 1

</llo_original>
